<compile_context>
chip_gen: v5e
topology: v5e:2x2
jax: 0.10.0
libtpu: 0.0.40
codegen_flags: <defaults>
</compile_context>

<pallas_src>
import functools

import jax
import jax.numpy as jnp
from jax.experimental import pallas as pl
from jax.experimental.pallas import tpu as pltpu


def fused_ln_add_kernel(pos_ref, gamma_ref, beta_ref, x_ref, o_ref, *, eps):
    # pos_ref:   (block_t, H) raw position-embedding rows for this T tile
    # gamma_ref: (1, H)       LayerNorm scale
    # beta_ref:  (1, H)       LayerNorm bias
    # x_ref:     (block_b, block_t, H) input activations tile
    # o_ref:     (block_b, block_t, H) output tile
    pos = pos_ref[...].astype(jnp.float32)
    mean = jnp.mean(pos, axis=-1, keepdims=True)
    centered = pos - mean
    var = jnp.mean(centered * centered, axis=-1, keepdims=True)   # biased var, like torch
    pe = centered * jax.lax.rsqrt(var + eps) * gamma_ref[...] + beta_ref[...]   # (block_t, H)
    # Hot path: broadcast add over the batch block (HBM-bound stream).
    o_ref[...] = (x_ref[...] + pe[None, :, :]).astype(o_ref.dtype)


def _pick_tiling(B, T, H, elem_bytes):
    """Pick (block_b, block_t) and a scoped-VMEM budget.

    Rules (perf review):
      * ~4-8 MiB per input block (amortize per-step overhead, near HBM roofline).
      * 4 live blocks (in+out double-buffered) + small operands must fit the
        scoped VMEM limit; cap the limit for v7x's 64 MiB per-core VMEM.
      * >= 2 total grid steps whenever possible so "parallel" axes can shard
        across v7x's two TensorCores.
    """
    try:
        vmem_cap = int(pltpu.get_tpu_info().vmem_capacity_bytes)
    except Exception:
        vmem_cap = 64 << 20                                # v7x per-TC size: safe lower bound
    vmem_limit = int(min(vmem_cap * 3 // 4, 64 << 20))     # headroom for Mosaic internals
    target_block = int(min(8 << 20, max(1 << 20, vmem_limit // 6)))

    row_bytes = T * H * elem_bytes                         # one batch element
    block_t = T
    block_b = max(1, min(B, target_block // max(row_bytes, 1)))
    if row_bytes > target_block and T > 8:
        # A single batch row overshoots the target: tile T too (multiple of 8).
        block_t = min(T, max(8, (target_block // (H * elem_bytes)) // 8 * 8))
        block_b = 1

    # Guarantee >= 2 grid steps when possible (v7x megacore sharding).
    if pl.cdiv(B, block_b) * pl.cdiv(T, block_t) < 2:
        if B >= 2:
            block_b = (B + 1) // 2
        elif T >= 16:
            block_t = max(8, (T // 2) // 8 * 8)
        # else: B == 1 and T <= 8 -> tiny single-step kernel; fine.
    return block_b, block_t, vmem_limit


def temporal_embeddings(inputs, emb_table, gamma, beta, dimensions, *, eps=1e-6):
    """inputs: [B, T, H] float32; emb_table: [max_buckets, H]; gamma/beta: [H]."""
    _, t, _ = dimensions
    B, T, H = inputs.shape
    assert T == t, "inputs temporal length must match dimensions[1]"
    assert emb_table.shape[0] >= t, "not enough temporal buckets"

    # arange(t) gather == slice of the first t rows (glue, not the hot path).
    pos_rows = emb_table[:t, :]                  # (T, H)
    gamma2 = gamma.reshape(1, H)
    beta2 = beta.reshape(1, H)

    block_b, block_t, vmem_limit = _pick_tiling(
        B, T, H, jnp.dtype(inputs.dtype).itemsize)
    grid = (pl.cdiv(B, block_b), pl.cdiv(T, block_t))

    out = pl.pallas_call(
        functools.partial(fused_ln_add_kernel, eps=eps),
        out_shape=jax.ShapeDtypeStruct((B, T, H), inputs.dtype),
        grid_spec=pltpu.PrefetchScalarGridSpec(
            num_scalar_prefetch=0,
            grid=grid,
            in_specs=[
                pl.BlockSpec((block_t, H), lambda i, j: (j, 0)),          # pos rows (tiny)
                pl.BlockSpec((1, H), lambda i, j: (0, 0)),                # gamma (shared)
                pl.BlockSpec((1, H), lambda i, j: (0, 0)),                # beta  (shared)
                pl.BlockSpec((block_b, block_t, H), lambda i, j: (i, j, 0)),  # inputs
            ],
            out_specs=pl.BlockSpec((block_b, block_t, H), lambda i, j: (i, j, 0)),
        ),
        compiler_params=pltpu.CompilerParams(
            dimension_semantics=("parallel", "parallel"),   # shard across TCs on v7x
            vmem_limit_bytes=vmem_limit,                    # raise scoped VMEM (v5e/v6e),
        ),                                                  # capped for v7x's 64 MiB VMEM
        # input_output_aliases={3: 0} could additionally reuse the input HBM
        # buffer (no bytes saved, just allocator pressure) if the caller donates.
    )(pos_rows, gamma2, beta2, inputs)

    return out


def reference(inputs, emb_table, gamma, beta, dimensions, eps=1e-6):
    _, t, _ = dimensions
    pos = emb_table[:t, :].astype(jnp.float32)
    mean = jnp.mean(pos, axis=-1, keepdims=True)
    var = jnp.mean((pos - mean) ** 2, axis=-1, keepdims=True)
    normed = (pos - mean) / jnp.sqrt(var + eps)
    pe = normed * gamma + beta
    return inputs + pe[None, :, :]


if __name__ == "__main__":
    # Small shapes consistent with the module's forward:
    #   batch=2, temporal length t=8, hidden=32, max_temporal_buckets=16
    B, T, H = 2, 8, 32
    MAX_BUCKETS = 16
    eps = 1e-6   # module default layer_norm_eps=1e-06

    key = jax.random.PRNGKey(0)
    k_in, k_emb, k_g, k_b = jax.random.split(key, 4)

    inputs = jax.random.normal(k_in, (B, T, H), dtype=jnp.float32)
    emb_table = jax.random.normal(k_emb, (MAX_BUCKETS, H), dtype=jnp.float32)
    # nn.LayerNorm default init is gamma=1, beta=0; perturb deterministically so
    # the affine part is actually exercised.
    gamma = jnp.ones((H,), jnp.float32) + 0.1 * jax.random.normal(k_g, (H,), jnp.float32)
    beta = 0.1 * jax.random.normal(k_b, (H,), jnp.float32)

    dimensions = (None, T, None)

    out = temporal_embeddings(inputs, emb_table, gamma, beta, dimensions, eps=eps)
    out = jax.block_until_ready(out)

    ref = reference(inputs, emb_table, gamma, beta, dimensions, eps=eps)
    assert out.shape == (B, T, H)
    assert out.dtype == jnp.float32
    assert jnp.allclose(out, ref, atol=1e-5, rtol=1e-5), "mismatch vs reference"

    print("KERNEL_OK")
</pallas_src>

<mosaic_0001>
module attributes {stable_mosaic.version = 11 : i64} {
  func.func @fused_ln_add_kernel(%arg0: i32, %arg1: i32, %arg2: memref<8x32xf32, #tpu.memory_space<vmem>>, %arg3: memref<1x32xf32, #tpu.memory_space<vmem>>, %arg4: memref<1x32xf32, #tpu.memory_space<vmem>>, %arg5: memref<1x8x32xf32, #tpu.memory_space<vmem>>, %arg6: memref<1x8x32xf32, #tpu.memory_space<vmem>>) attributes {dimension_semantics = [#tpu.dimension_semantics<parallel>, #tpu.dimension_semantics<parallel>], iteration_bounds = array<i64: 2, 1>, scalar_prefetch = 0 : i64, scratch_operands = 0 : i64, tpu.core_type = #tpu.core_type<tc>, window_params = [{transform_indices = @transform_0, window_bounds = array<i64: 8, 32>}, {pipeline_mode = #tpu.pipeline_mode<synchronous>, transform_indices = @transform_1, window_bounds = array<i64: 1, 32>}, {pipeline_mode = #tpu.pipeline_mode<synchronous>, transform_indices = @transform_2, window_bounds = array<i64: 1, 32>}, {transform_indices = @transform_3, window_bounds = array<i64: 1, 8, 32>}, {transform_indices = @transform_4, window_bounds = array<i64: 1, 8, 32>}]} {
    %c0 = arith.constant 0 : index
    %c0_0 = arith.constant 0 : index
    %0 = vector.load %arg2[%c0, %c0_0] : memref<8x32xf32, #tpu.memory_space<vmem>>, vector<8x32xf32>
    %cst = arith.constant dense<0.000000e+00> : vector<8xf32>
    %1 = vector.multi_reduction <add>, %0, %cst [1] : vector<8x32xf32> to vector<8xf32>
    %2 = vector.shape_cast %1 : vector<8xf32> to vector<8x1xf32>
    %cst_1 = arith.constant 3.200000e+01 : f32
    %3 = vector.broadcast %cst_1 : f32 to vector<8x1xf32>
    %4 = arith.divf %2, %3 : vector<8x1xf32>
    %5 = vector.broadcast %4 : vector<8x1xf32> to vector<8x32xf32>
    %6 = arith.subf %0, %5 : vector<8x32xf32>
    %7 = arith.mulf %6, %6 : vector<8x32xf32>
    %cst_2 = arith.constant dense<0.000000e+00> : vector<8xf32>
    %8 = vector.multi_reduction <add>, %7, %cst_2 [1] : vector<8x32xf32> to vector<8xf32>
    %9 = vector.shape_cast %8 : vector<8xf32> to vector<8x1xf32>
    %cst_3 = arith.constant 3.200000e+01 : f32
    %10 = vector.broadcast %cst_3 : f32 to vector<8x1xf32>
    %11 = arith.divf %9, %10 : vector<8x1xf32>
    %cst_4 = arith.constant 9.99999997E-7 : f32
    %12 = vector.broadcast %cst_4 : f32 to vector<8x1xf32>
    %13 = arith.addf %11, %12 : vector<8x1xf32>
    %14 = math.rsqrt %13 : vector<8x1xf32>
    %15 = vector.broadcast %14 : vector<8x1xf32> to vector<8x32xf32>
    %16 = arith.mulf %6, %15 : vector<8x32xf32>
    %c0_5 = arith.constant 0 : index
    %c0_6 = arith.constant 0 : index
    %17 = vector.load %arg3[%c0_5, %c0_6] : memref<1x32xf32, #tpu.memory_space<vmem>>, vector<1x32xf32>
    %18 = vector.broadcast %17 : vector<1x32xf32> to vector<8x32xf32>
    %19 = arith.mulf %16, %18 : vector<8x32xf32>
    %c0_7 = arith.constant 0 : index
    %c0_8 = arith.constant 0 : index
    %20 = vector.load %arg4[%c0_7, %c0_8] : memref<1x32xf32, #tpu.memory_space<vmem>>, vector<1x32xf32>
    %21 = vector.broadcast %20 : vector<1x32xf32> to vector<8x32xf32>
    %22 = arith.addf %19, %21 : vector<8x32xf32>
    %c0_9 = arith.constant 0 : index
    %c0_10 = arith.constant 0 : index
    %c0_11 = arith.constant 0 : index
    %23 = vector.load %arg5[%c0_9, %c0_10, %c0_11] : memref<1x8x32xf32, #tpu.memory_space<vmem>>, vector<1x8x32xf32>
    %24 = vector.shape_cast %22 : vector<8x32xf32> to vector<1x8x32xf32>
    %25 = arith.addf %23, %24 : vector<1x8x32xf32>
    %c0_12 = arith.constant 0 : index
    %c0_13 = arith.constant 0 : index
    %c0_14 = arith.constant 0 : index
    %26 = vector.load %arg6[%c0_12, %c0_13, %c0_14] : memref<1x8x32xf32, #tpu.memory_space<vmem>>, vector<1x8x32xf32>
    tpu.vector_store %arg6[%c0_12, %c0_13, %c0_14], %25 {strides = array<i32>} : memref<1x8x32xf32, #tpu.memory_space<vmem>>, vector<1x8x32xf32>,
    return
  }
  func.func @transform_0(%arg0: i32, %arg1: i32) -> (i32, i32) {
    %c0_i32 = arith.constant 0 : i32
    %c0_i32_0 = arith.constant 0 : i32
    return %arg1, %c0_i32 : i32, i32
  }
  func.func @transform_1(%arg0: i32, %arg1: i32) -> (i32, i32) {
    %c0_i32 = arith.constant 0 : i32
    %c0_i32_0 = arith.constant 0 : i32
    %c0_i32_1 = arith.constant 0 : i32
    return %c0_i32, %c0_i32_0 : i32, i32
  }
  func.func @transform_2(%arg0: i32, %arg1: i32) -> (i32, i32) {
    %c0_i32 = arith.constant 0 : i32
    %c0_i32_0 = arith.constant 0 : i32
    %c0_i32_1 = arith.constant 0 : i32
    return %c0_i32, %c0_i32_0 : i32, i32
  }
  func.func @transform_3(%arg0: i32, %arg1: i32) -> (i32, i32, i32) {
    %c0_i32 = arith.constant 0 : i32
    %c0_i32_0 = arith.constant 0 : i32
    return %arg0, %arg1, %c0_i32 : i32, i32, i32
  }
  func.func @transform_4(%arg0: i32, %arg1: i32) -> (i32, i32, i32) {
    %c0_i32 = arith.constant 0 : i32
    %c0_i32_0 = arith.constant 0 : i32
    return %arg0, %arg1, %c0_i32 : i32, i32, i32
  }
}

</mosaic_0001>

<llo_original>
// kernel: tpu_custom_call.1
$region0: #{tpu_custom_call.1}
  #allocation0 [shape = 'u32[]', space=smem, size = 0x4, offset = 0x4, fixed_abs, tag = 'smem constant byte address 0x4 - core index']
  #allocation1 [shape = 'u32[72,128]{1,0:T(1,128)}', space=vmem, size = 0x9000, scoped, tag = 'internal scratch']
  %s0 = inlined_call_operand.hbm [shape: f32[8,32], index: 0, kind: input, shape index: {}]
  %s1 = inlined_call_operand.hbm [shape: f32[1,32], index: 1, kind: input, shape index: {}]
  %s2 = inlined_call_operand.vmem [shape: f32[1,32], index: 2, kind: input, shape index: {}]
  %s3 = inlined_call_operand.hbm [shape: f32[2,8,32], index: 3, kind: input, shape index: {}]
  %s4 = inlined_call_operand.hbm [shape: f32[2,8,32], index: 4, kind: output, shape index: {}]
  %s5 = sld [smem:[#allocation0]]
  $region61: #{tpu_custom_call.1} parent=0
    _
  %s7 = ssub.s32 1, %s5
  %s8 = scalar_select 0, %s7, %s5
  $region1: #{tpu_custom_call.1} parent=0
    #allocation2 [shape = 'u8[4096]{0}', space=vmem, size = 0x1000, scoped, tag = 'input window, operand 0, single buffered']
    #allocation3 [shape = 's32[2]{0}', space=sflag, size = 0x8, scoped, tag = 'scoped memory for tpu_custom_call.1']
    #allocation4 [shape = 's32[2]{0}', space=sflag, size = 0x8, scoped, tag = 'scoped memory for tpu_custom_call.1']
    #allocation5 [shape = 'u8[512]{0}', space=vmem, size = 0x400, scoped, tag = 'input window, operand 1, single buffered']
    #allocation6 [shape = 's32[1]{0}', space=sflag, size = 0x4, scoped, tag = 'scoped memory for tpu_custom_call.1']
    #allocation7 [shape = 'u8[8192]{0}', space=vmem, size = 0x2000, scoped, tag = 'input window, operand 3']
    #allocation8 [shape = 'u8[8192]{0}', space=vmem, size = 0x2000, scoped, tag = 'output window, operand 0']
    %9 = vsyncpa [#allocation3], 0
    %10 = vsyncpa [#allocation6], 0
    %11 = vsyncpa [#allocation4], 0
    %s12 = scalar_lea.sflag [#allocation4], 1
    %13 = vsyncpa %s12, 0
    loop: start=0, step=1, limit=4
    $region2: #{tpu_custom_call.1} parent=1 // loop_pre_header
      _
    $region3: #{tpu_custom_call.1} parent=1 // loop_header
      %s15 = sphi 0, %s19
      %p16 = scmp.ge.s32.totalorder %s15, 4
      %s22 = sphi 0, %s34
      %s23 = sphi 0, %s30
      %s24 = sphi 0, %s22
      %s25 = sphi 0, %s23
      %s26 = sphi 0, %s24
      %s27 = sphi 0, %s25
      %s37 = sphi 0, %s39
      %s40 = sphi 0, %s37
      %s41 = sphi 0, %s40
      %s57 = sphi 0, %s41
      %s61 = sphi 0, %s61
      %s63 = sphi 0, %s61
      %s64 = sphi 0, %s63
      %s78 = sphi 0, %s64
      %s82 = sphi 0, %s82
      %s84 = sphi 0, %s82
      %s85 = sphi 0, %s84
      %s99 = sphi 0, %s85
      %s107 = sphi 0, %s109
      %s110 = sphi 0, %s107
      %s111 = sphi 0, %s110
      %s127 = sphi 0, %s111
      %s135 = sphi 0, %s137
      %s138 = sphi 0, %s135
      %s139 = sphi 0, %s138
      %s155 = sphi 0, %s139
    $region4: #{tpu_custom_call.1} parent=1 // loop_header_branch
      %18 = sbr.rel (%p16) target = $region8
    $region5: #{tpu_custom_call.1} parent=1 // loop_body
      %s20 = ssub.s32 %s15, 1
      %s21 = ssub.s32 %s15, 2
      %s28 = sadd.s32 1, %s23
      %p29 = scmp.ge.s32.totalorder %s28, 1
      %s30 = scalar_select %p29, 0, %s28
      %s31 = sadd.s32 1, %s22
      %s32 = scalar_select %p29, %s31, %s22
      %p33 = scmp.ge.s32.totalorder %s32, 2
      %s34 = scalar_select %p33, 0, %s32
      %s35 = ssub.s32 %s23, %s30
      %p36 = scmp.eq.s32.totalorder %s35, 0
      %s38 = sadd.s32 %s37, 1
      %s39 = scalar_select %p36, %s37, %s38
      %p42 = pneg %p36
      %p43 = scmp.eq.s32.totalorder %s15, 1
      %p44 = por %p42, %p43
      %p45 = scmp.ne.s32.totalorder %s37, %s40
      %p46 = scmp.eq.s32.totalorder %s15, 0
      %p47 = por %p45, %p46
      %p48 = scmp.ne.s32.totalorder %s37, %s40
      %p49 = scmp.eq.s32.totalorder %s20, 1
      %p50 = por %p48, %p49
      %p51 = scmp.ne.s32.totalorder %s40, %s41
      %p52 = scmp.eq.s32.totalorder %s20, 0
      %p53 = por %p51, %p52
      %p54 = scmp.ne.s32.totalorder %s40, %s41
      %p55 = scmp.eq.s32.totalorder %s21, 1
      %p56 = por %p54, %p55
      %p58 = scmp.ne.s32.totalorder %s41, %s57
      %p59 = scmp.eq.s32.totalorder %s21, 0
      %p60 = por %p58, %p59
      %s62 = sadd.s32 %s61, 1
      %p65 = scmp.eq.s32.totalorder %s15, 1
      %p66 = scmp.ne.s32.totalorder %s61, %s63
      %p67 = scmp.eq.s32.totalorder %s15, 0
      %p68 = por %p66, %p67
      %p69 = scmp.ne.s32.totalorder %s61, %s63
      %p70 = scmp.eq.s32.totalorder %s20, 1
      %p71 = por %p69, %p70
      %p72 = scmp.ne.s32.totalorder %s63, %s64
      %p73 = scmp.eq.s32.totalorder %s20, 0
      %p74 = por %p72, %p73
      %p75 = scmp.ne.s32.totalorder %s63, %s64
      %p76 = scmp.eq.s32.totalorder %s21, 1
      %p77 = por %p75, %p76
      %p79 = scmp.ne.s32.totalorder %s64, %s78
      %p80 = scmp.eq.s32.totalorder %s21, 0
      %p81 = por %p79, %p80
      %s83 = sadd.s32 %s82, 1
      %p86 = scmp.eq.s32.totalorder %s15, 1
      %p87 = scmp.ne.s32.totalorder %s82, %s84
      %p88 = scmp.eq.s32.totalorder %s15, 0
      %p89 = por %p87, %p88
      %p90 = scmp.ne.s32.totalorder %s82, %s84
      %p91 = scmp.eq.s32.totalorder %s20, 1
      %p92 = por %p90, %p91
      %p93 = scmp.ne.s32.totalorder %s84, %s85
      %p94 = scmp.eq.s32.totalorder %s20, 0
      %p95 = por %p93, %p94
      %p96 = scmp.ne.s32.totalorder %s84, %s85
      %p97 = scmp.eq.s32.totalorder %s21, 1
      %p98 = por %p96, %p97
      %p100 = scmp.ne.s32.totalorder %s85, %s99
      %p101 = scmp.eq.s32.totalorder %s21, 0
      %p102 = por %p100, %p101
      %s103 = ssub.s32 %s22, %s34
      %s104 = ssub.s32 %s23, %s30
      %s105 = sor.u32 %s103, %s104
      %p106 = scmp.eq.s32.totalorder %s105, 0
      %s108 = sadd.s32 %s107, 1
      %s109 = scalar_select %p106, %s107, %s108
      %p112 = pneg %p106
      %p113 = scmp.eq.s32.totalorder %s15, 1
      %p114 = por %p112, %p113
      %p115 = scmp.ne.s32.totalorder %s107, %s110
      %p116 = scmp.eq.s32.totalorder %s15, 0
      %p117 = por %p115, %p116
      %p118 = scmp.ne.s32.totalorder %s107, %s110
      %p119 = scmp.eq.s32.totalorder %s20, 1
      %p120 = por %p118, %p119
      %p121 = scmp.ne.s32.totalorder %s110, %s111
      %p122 = scmp.eq.s32.totalorder %s20, 0
      %p123 = por %p121, %p122
      %p124 = scmp.ne.s32.totalorder %s110, %s111
      %p125 = scmp.eq.s32.totalorder %s21, 1
      %p126 = por %p124, %p125
      %p128 = scmp.ne.s32.totalorder %s111, %s127
      %p129 = scmp.eq.s32.totalorder %s21, 0
      %p130 = por %p128, %p129
      %s131 = ssub.s32 %s22, %s34
      %s132 = ssub.s32 %s23, %s30
      %s133 = sor.u32 %s131, %s132
      %p134 = scmp.eq.s32.totalorder %s133, 0
      %s136 = sadd.s32 %s135, 1
      %s137 = scalar_select %p134, %s135, %s136
      %p140 = pneg %p134
      %p141 = scmp.eq.s32.totalorder %s15, 1
      %p142 = por %p140, %p141
      %p143 = scmp.ne.s32.totalorder %s135, %s138
      %p144 = scmp.eq.s32.totalorder %s15, 0
      %p145 = por %p143, %p144
      %p146 = scmp.ne.s32.totalorder %s135, %s138
      %p147 = scmp.eq.s32.totalorder %s20, 1
      %p148 = por %p146, %p147
      %p149 = scmp.ne.s32.totalorder %s138, %s139
      %p150 = scmp.eq.s32.totalorder %s20, 0
      %p151 = por %p149, %p150
      %p152 = scmp.ne.s32.totalorder %s138, %s139
      %p153 = scmp.eq.s32.totalorder %s21, 1
      %p154 = por %p152, %p153
      %p156 = scmp.ne.s32.totalorder %s139, %s155
      %p157 = scmp.eq.s32.totalorder %s21, 0
      %p158 = por %p156, %p157
      %p159 = scmp.le.s32.totalorder 1, %s15
      %p160 = scmp.lt.s32.totalorder %s15, 3
      %p161 = pnand %p159, %p160
      %p162 = pneg %p161
      // Predicated region
      $region9: #{tpu_custom_call.1} parent=5 // pred_check
        _
      $region10: #{tpu_custom_call.1} parent=5 // pred_check_branch
        %164 = sbr.rel (%p161) target = $region12
      $region11: #{tpu_custom_call.1} parent=5 // pred_region
        %s165 = ssub.s32 %s15, 1
        // Predicated region
        $region13: #{tpu_custom_call.1} parent=11 // pred_check
          %p166 = pneg %p53
        $region14: #{tpu_custom_call.1} parent=11 // pred_check_branch
          %168 = sbr.rel (%p166) target = $region16
        $region15: #{tpu_custom_call.1} parent=11 // pred_region
          %170 = vsyncadd [#allocation3], 0
          %s171 = smul.addr %s25, 8
          %s172 = scalar_lea.hbm %s0, %s171
          %s174 = sshll.u32 %s172, 4
          %s175 = int_to_ptr.hbm [resolvable:$true] %s174
          %s176 = sshll.u32 [#allocation2], 4
          %s177 = int_to_ptr.vmem [resolvable:$true] %s176
          %179 = dma.hbm_to_vmem [thread:$0]  %s175, 128, %s177, [#allocation3]
        $region16: #{tpu_custom_call.1} parent=11 // pred_fallthru
          _
        // Predicated region
        $region17: #{tpu_custom_call.1} parent=11 // pred_check
          %p180 = pneg %p74
        $region18: #{tpu_custom_call.1} parent=11 // pred_check_branch
          %182 = sbr.rel (%p180) target = $region20
        $region19: #{tpu_custom_call.1} parent=11 // pred_region
          %184 = vsyncadd [#allocation6], 0
          %s186 = sshll.u32 %s1, 4
          %s187 = int_to_ptr.hbm [resolvable:$true] %s186
          %s188 = sshll.u32 [#allocation5], 4
          %s189 = int_to_ptr.vmem [resolvable:$true] %s188
          %191 = dma.hbm_to_vmem [thread:$0]  %s187, 16, %s189, [#allocation6]
        $region20: #{tpu_custom_call.1} parent=11 // pred_fallthru
          _
        // Predicated region
        $region21: #{tpu_custom_call.1} parent=11 // pred_check
          %p192 = pneg %p95
        $region22: #{tpu_custom_call.1} parent=11 // pred_check_branch
          %194 = sbr.rel (%p192) target = $region24
        $region23: #{tpu_custom_call.1} parent=11 // pred_region
          _
        $region24: #{tpu_custom_call.1} parent=11 // pred_fallthru
          _
      $region12: #{tpu_custom_call.1} parent=5 // pred_fallthru
        _
      %p195 = scmp.lt.s32.totalorder %s15, 2
      // Predicated region
      $region25: #{tpu_custom_call.1} parent=5 // pred_check
        %p196 = pneg %p195
      $region26: #{tpu_custom_call.1} parent=5 // pred_check_branch
        %198 = sbr.rel (%p196) target = $region28
      $region27: #{tpu_custom_call.1} parent=5 // pred_region
        // Predicated region
        $region29: #{tpu_custom_call.1} parent=27 // pred_check
          %p199 = pneg %p117
        $region30: #{tpu_custom_call.1} parent=27 // pred_check_branch
          %201 = sbr.rel (%p199) target = $region32
        $region31: #{tpu_custom_call.1} parent=27 // pred_region
          %s202 = sand.u32 %s15, 1
          %s203 = scalar_lea.sflag [#allocation3], %s202
          %s204 = sand.u32 %s107, 1
          %s205 = smul.addr %s204, 8
          %s206 = scalar_lea.vmem [#allocation7], %s205
          %208 = vsyncadd %s203, 0
          %s209 = sadd.s32 %s23, %s22
          %s210 = smul.addr %s209, 8
          %s211 = scalar_lea.hbm %s3, %s210
          %s213 = sshll.u32 %s211, 4
          %s214 = int_to_ptr.hbm [resolvable:$true] %s213
          %s215 = sshll.u32 %s206, 4
          %s216 = int_to_ptr.vmem [resolvable:$true] %s215
          %218 = dma.hbm_to_vmem [thread:$0]  %s214, 128, %s216, %s203
        $region32: #{tpu_custom_call.1} parent=27 // pred_fallthru
          _
      $region28: #{tpu_custom_call.1} parent=5 // pred_fallthru
        _
      %p219 = scmp.le.s32.totalorder 1, %s15
      %p220 = scmp.lt.s32.totalorder %s15, 3
      %p221 = pnand %p219, %p220
      %p222 = pneg %p221
      // Predicated region
      $region33: #{tpu_custom_call.1} parent=5 // pred_check
        _
      $region34: #{tpu_custom_call.1} parent=5 // pred_check_branch
        %224 = sbr.rel (%p221) target = $region36
      $region35: #{tpu_custom_call.1} parent=5 // pred_region
        %s225 = ssub.s32 %s15, 1
        // Predicated region
        $region37: #{tpu_custom_call.1} parent=35 // pred_check
          %p226 = pneg %p53
        $region38: #{tpu_custom_call.1} parent=35 // pred_check_branch
          %228 = sbr.rel (%p226) target = $region40
        $region39: #{tpu_custom_call.1} parent=35 // pred_region
          %230 = dma.done [#allocation3], 128
        $region40: #{tpu_custom_call.1} parent=35 // pred_fallthru
          _
        // Predicated region
        $region41: #{tpu_custom_call.1} parent=35 // pred_check
          %p231 = pneg %p74
        $region42: #{tpu_custom_call.1} parent=35 // pred_check_branch
          %233 = sbr.rel (%p231) target = $region44
        $region43: #{tpu_custom_call.1} parent=35 // pred_region
          %235 = dma.done [#allocation6], 16
        $region44: #{tpu_custom_call.1} parent=35 // pred_fallthru
          _
        %s236 = sand.u32 %s20, 1
        %s237 = scalar_lea.sflag [#allocation3], %s236
        %s238 = sand.u32 %s110, 1
        %s239 = smul.addr %s238, 8
        %s240 = scalar_lea.vmem [#allocation7], %s239
        // Predicated region
        $region45: #{tpu_custom_call.1} parent=35 // pred_check
          %p241 = pneg %p123
        $region46: #{tpu_custom_call.1} parent=35 // pred_check_branch
          %243 = sbr.rel (%p241) target = $region48
        $region47: #{tpu_custom_call.1} parent=35 // pred_region
          %245 = dma.done %s237, 128
        $region48: #{tpu_custom_call.1} parent=35 // pred_fallthru
          _
        %p246 = pneg %p53
        %p247 = pneg %p50
        %p248 = pneg %p74
        %p249 = pneg %p71
        %p250 = pneg %p95
        %p251 = pneg %p92
        %s252 = sand.u32 %s20, 1
        %s253 = scalar_lea.sflag [#allocation3], %s252
        %s254 = sand.u32 %s110, 1
        %s255 = smul.addr %s254, 8
        %s256 = scalar_lea.vmem [#allocation7], %s255
        %p257 = pneg %p123
        %p258 = pneg %p120
        %p259 = pneg %p151
        %p260 = pneg %p148
        %s261 = sand.u32 %s138, 1
        %s262 = scalar_lea.sflag [#allocation4], %s261
        %s263 = sand.u32 %s138, 1
        %s264 = smul.addr %s263, 8
        %s265 = scalar_lea.vmem [#allocation8], %s264
        %v266 = vld [vmem:[#allocation2] sm:$0xff]
        %vm267 = vcmask 261120
        %v268 = vsel %vm267, %v266, 0.0
        %269 = vadd.xlane.f32.xlu0 %v268
        %v270 = vpop.xlane.xlu0 %269
        %v271 = vrcp.pop 32.0
        %v272 = vmul.f32 32.0, %v271
        %v273 = vsub.f32 1.0, %v272
        %v274 = vmul.f32 %v271, %v273
        %v275 = vadd.f32 %v271, %v274
        %vm276 = vweird.f32 %v271
        %v277 = vsel %vm276, %v271, %v275
        %v278 = vmul.f32 %v270, %v277
        %v279 = vsub.f32 %v266, %v278
        %v280 = vmul.f32 %v279, %v279
        %v281 = vsel %vm267, %v280, 0.0
        %282 = vadd.xlane.f32.xlu0 %v281
        %v283 = vpop.xlane.xlu0 %282
        %v284 = vmul.f32 %v283, %v277
        %v285 = vadd.f32 %v284, 1e-06
        %v286 = vrsqrt.pop %v285
        %v287 = vmul.f32 %v286, %v285
        %v288 = vmul.f32 %v287, %v286
        %v289 = vmul.f32 0.5, %v288
        %v290 = vsub.f32 1.5, %v289
        %v291 = vmul.f32 %v286, %v290
        %vm292 = vweird.f32 %v285
        %vm293 = vweird.f32 %v286
        %vm294 = vmor %vm292, %vm293
        %v295 = vsel %vm294, %v286, %v291
        %v296 = vmul.f32 %v279, %v295
        %v297 = vld [vmem:[#allocation5] sm:$0x1]
        %v299 = vperm.slane %v297, 0
        %v301 = vmul.f32 %v296, %v299
        %v302 = vld [vmem:[%s2] sm:$0x1]
        %v304 = vperm.slane %v302, 0
        %v306 = vadd.f32 %v301, %v304
        %v307 = vld [vmem:[%s240] sm:$0xff]
        %v308 = vadd.f32 %v307, %v306
        %309 = vst.msk [vmem:[%s265] sm:$0xff] %vm267, %v308
        %s310 = sand.u32 %s138, 1
        %s311 = scalar_lea.sflag [#allocation4], %s310
        %s312 = sand.u32 %s138, 1
        %s313 = smul.addr %s312, 8
        %s314 = scalar_lea.vmem [#allocation8], %s313
        // Predicated region
        $region49: #{tpu_custom_call.1} parent=35 // pred_check
          %p315 = pneg %p148
        $region50: #{tpu_custom_call.1} parent=35 // pred_check_branch
          %317 = sbr.rel (%p315) target = $region52
        $region51: #{tpu_custom_call.1} parent=35 // pred_region
          %319 = vsyncadd %s311, 0
          %s320 = sadd.s32 %s25, %s24
          %s321 = smul.addr %s320, 8
          %s322 = scalar_lea.hbm %s4, %s321
          %s324 = sshll.u32 %s314, 4
          %s325 = int_to_ptr.vmem [resolvable:$true] %s324
          %s326 = sshll.u32 %s322, 4
          %s327 = int_to_ptr.hbm [resolvable:$true] %s326
          %329 = dma.vmem_to_hbm [thread:$0]  %s325, 128, %s327, %s311
        $region52: #{tpu_custom_call.1} parent=35 // pred_fallthru
          _
      $region36: #{tpu_custom_call.1} parent=5 // pred_fallthru
        _
      %p330 = scmp.le.s32.totalorder 2, %s15
      // Predicated region
      $region53: #{tpu_custom_call.1} parent=5 // pred_check
        %p331 = pneg %p330
      $region54: #{tpu_custom_call.1} parent=5 // pred_check_branch
        %333 = sbr.rel (%p331) target = $region56
      $region55: #{tpu_custom_call.1} parent=5 // pred_region
        %s334 = ssub.s32 %s15, 2
        // Predicated region
        $region57: #{tpu_custom_call.1} parent=55 // pred_check
          %p335 = pneg %p154
        $region58: #{tpu_custom_call.1} parent=55 // pred_check_branch
          %337 = sbr.rel (%p335) target = $region60
        $region59: #{tpu_custom_call.1} parent=55 // pred_region
          %s338 = sand.u32 %s139, 1
          %s339 = scalar_lea.sflag [#allocation4], %s338
          %s340 = sand.u32 %s139, 1
          %s341 = smul.addr %s340, 8
          %s342 = scalar_lea.vmem [#allocation8], %s341
          %344 = dma.done %s339, 128
        $region60: #{tpu_custom_call.1} parent=55 // pred_fallthru
          _
      $region56: #{tpu_custom_call.1} parent=5 // pred_fallthru
        _
    $region6: #{tpu_custom_call.1} parent=1 // loop_footer
      %s19 = sadd.s32 1, %s15
    $region7: #{tpu_custom_call.1} parent=1 // loop_footer_branch
      %14 = sbr.rel target = $region3
    $region8: #{tpu_custom_call.1} parent=1 // loop_exit
      _
    %345 = vsyncpa [#allocation3], 1
    %s346 = scalar_lea.sflag [#allocation3], 1
    %347 = vsyncpa %s346, 1
    %348 = vsyncpa [#allocation6], 1
    %349 = vsyncpa [#allocation4], 1
    %s350 = scalar_lea.sflag [#allocation4], 1
    %351 = vsyncpa %s350, 1

</llo_original>
